<compile_context>
chip_gen: v5e
topology: v5e:2x2
jax: 0.10.0
libtpu: 0.0.40
codegen_flags: <defaults>
</compile_context>

<pallas_src>
import jax
import jax.numpy as jnp
import numpy as np
from jax.experimental import pallas as pl
from jax.experimental.pallas import tpu as pltpu

EPS = 1e-5


# --------------------------------------------------------------------------
# Fused kernel factory (shapes closed over as static Python ints).
# --------------------------------------------------------------------------
def _make_double_conv_kernel(N, H, W, Cin, Cout):
    NH = N * H
    WCI = W * Cin
    WCO = W * Cout
    inv_count = 1.0 / float(N * H * W)

    def channel_totals(row):
        # row: (1, W*Cout); lane j belongs to channel j % Cout.  log2(W) cyclic
        # roll-and-adds (XLU slot) leave every lane holding its channel's total,
        # already tiled across the W positions (requires power-of-two W).
        t = row
        shift = Cout
        while shift < WCO:
            t = t + pltpu.roll(t, shift, 1)
            shift *= 2
        return t

    def bn_relu(acc, gamma_l, beta_l):
        # acc: (N*H, W*Cout) f32 conv output.  Single-pass batch stats, all in f32
        # (fine at this scale; use Welford / reduce-then-normalize when tiling up).
        s1 = channel_totals(jnp.sum(acc, axis=0, keepdims=True))
        s2 = channel_totals(jnp.sum(acc * acc, axis=0, keepdims=True))
        mean = s1 * inv_count
        var = s2 * inv_count - mean * mean      # biased, matches PyTorch train-mode BN
        scale = jax.lax.rsqrt(var + EPS) * gamma_l
        return jnp.maximum((acc - mean) * scale + beta_l, 0.0)

    def fill_slab(slab_ref, act, wc):
        # slab_ref: (N, H, 3*wc); row h, dy-block d holds act[h-1+d] (zero if OOB).
        # Halo-only zero fill: just two (N,1,wc) strips; every other element is
        # written exactly once below.
        slab_ref[:, 0:1, 0:wc] = jnp.zeros((N, 1, wc), slab_ref.dtype)              # top halo
        slab_ref[:, H - 1:H, 2 * wc:3 * wc] = jnp.zeros((N, 1, wc), slab_ref.dtype)  # bottom halo
        slab_ref[:, 1:H, 0:wc] = act[:, 0:H - 1, :]           # dy = 0 taps
        slab_ref[:, :, wc:2 * wc] = act                       # dy = 1 taps (aligned, full)
        slab_ref[:, 0:H - 1, 2 * wc:3 * wc] = act[:, 1:H, :]  # dy = 2 taps

    def conv3x3(slab_ref, w_ref, wc):
        # ONE MXU dot per layer: M = N*H, K = 3*W*C_layer, N = W*Cout.
        # bf16 operands, f32 accumulate.
        lhs = slab_ref[...].astype(jnp.bfloat16).reshape(NH, 3 * wc)
        return jnp.dot(lhs, w_ref[...], preferred_element_type=jnp.float32)

    def kernel(x_ref, w1_ref, g1_ref, b1_ref, w2_ref, g2_ref, b2_ref,
               o_ref, s1_ref, s2_ref):
        # ---- layer 1: conv -> BN(train) -> ReLU
        fill_slab(s1_ref, x_ref[...], WCI)
        h1 = bn_relu(conv3x3(s1_ref, w1_ref, WCI), g1_ref[...], b1_ref[...])

        # ---- layer 2: same structure on the hidden activation (never leaves VMEM)
        fill_slab(s2_ref, h1.reshape(N, H, WCO), WCO)
        h2 = bn_relu(conv3x3(s2_ref, w2_ref, WCO), g2_ref[...], b2_ref[...])

        # (N, H, W*Cout): 128-lane-dense, unmasked stores.
        o_ref[...] = h2.reshape(N, H, WCO)

    return kernel


# --------------------------------------------------------------------------
# Host-side weight prep (run once per weight update, NOT per forward call).
# --------------------------------------------------------------------------
def _band_weights(w, W):
    """(3,3,Cin,Cout) -> (3*W*Cin, W*Cout) band matrix B such that a slab row holding
    [x[h-1], x[h], x[h+1]] (each lane-folded as w*Cin+ci, OOB rows zero) @ B performs
    the full 3x3 conv for output row h directly in lane-dense w*Cout+co layout.
    dx boundary zeros are baked in: out-of-range taps map to all-zero rows of B."""
    kH, kW, Cin, Cout = w.shape
    pos = jnp.arange(W)[:, None] + jnp.arange(kW)[None, :] - 1              # (W_out, kW) -> input col
    ind = (pos[:, :, None] == jnp.arange(W)[None, None, :]).astype(w.dtype)  # (W_out, kW, W_in)
    b = jnp.einsum("wxp,yxio->ypiwo", ind, w)                               # (kH, W_in, Cin, W_out, Cout)
    return b.reshape(kH * W * Cin, W * Cout)


def prepare_params(p, W):
    """Precompute banded bf16 conv weights and lane-tiled f32 BN params."""
    f32 = jnp.float32
    return {
        "w1b": _band_weights(p["w1"].astype(f32), W).astype(jnp.bfloat16),
        "w2b": _band_weights(p["w2"].astype(f32), W).astype(jnp.bfloat16),
        "g1": jnp.tile(p["g1"].astype(f32), (1, W)),
        "beta1": jnp.tile(p["beta1"].astype(f32), (1, W)),
        "g2": jnp.tile(p["g2"].astype(f32), (1, W)),
        "beta2": jnp.tile(p["beta2"].astype(f32), (1, W)),
        # Conv biases p["b1"]/p["b2"] intentionally omitted: a per-channel constant
        # before training-mode BN is cancelled by the mean subtraction.
    }


@jax.jit
def double_conv_forward(x_nchw, prepped):
    N, Cin, H, W = x_nchw.shape
    Cout = prepped["g1"].shape[-1] // W
    assert W & (W - 1) == 0, "roll-fold BN reduction assumes power-of-two W"
    WCI, WCO = W * Cin, W * Cout

    x = jnp.transpose(x_nchw, (0, 2, 3, 1)).astype(jnp.float32)   # NHWC
    x = x.reshape(N, H, WCI)                                      # lane-folded rows

    kernel = _make_double_conv_kernel(N, H, W, Cin, Cout)
    flops = 2 * N * H * (3 * WCI + 3 * WCO) * WCO
    bytes_accessed = (N * H * WCI * 4 + prepped["w1b"].size * 2 + prepped["w2b"].size * 2
                      + 4 * WCO * 4 + N * H * WCO * 4)

    out = pl.pallas_call(
        kernel,
        out_shape=jax.ShapeDtypeStruct((N, H, WCO), jnp.float32),
        scratch_shapes=[
            pltpu.VMEM((N, H, 3 * WCI), jnp.float32),    # layer-1 dy-stacked slab
            pltpu.VMEM((N, H, 3 * WCO), jnp.float32),    # layer-2 dy-stacked slab
        ],
        cost_estimate=pl.CostEstimate(flops=flops, transcendentals=2 * WCO,
                                      bytes_accessed=bytes_accessed),
    )(x, prepped["w1b"], prepped["g1"], prepped["beta1"],
      prepped["w2b"], prepped["g2"], prepped["beta2"])

    out = out.reshape(N, H, W, Cout)
    return jnp.transpose(out, (0, 3, 1, 2))                       # NCHW


def init_params(key, in_ch, out_ch):
    ks = jax.random.split(key, 8)
    return {
        "w1": 0.1 * jax.random.normal(ks[0], (3, 3, in_ch, out_ch), jnp.float32),
        "b1": 0.1 * jax.random.normal(ks[1], (1, out_ch), jnp.float32),
        "g1": 1.0 + 0.1 * jax.random.normal(ks[2], (1, out_ch), jnp.float32),
        "beta1": 0.1 * jax.random.normal(ks[3], (1, out_ch), jnp.float32),
        "w2": 0.1 * jax.random.normal(ks[4], (3, 3, out_ch, out_ch), jnp.float32),
        "b2": 0.1 * jax.random.normal(ks[5], (1, out_ch), jnp.float32),
        "g2": 1.0 + 0.1 * jax.random.normal(ks[6], (1, out_ch), jnp.float32),
        "beta2": 0.1 * jax.random.normal(ks[7], (1, out_ch), jnp.float32),
    }


# Pure-JAX f32 reference (keeps the conv bias; training-mode BN cancels it, which is
# why the Pallas kernel can skip it without changing the forward output).
def _ref_double_conv(x_nchw, p):
    def conv(x, w, b):
        y = jax.lax.conv_general_dilated(
            x, w, window_strides=(1, 1), padding="SAME",
            dimension_numbers=("NHWC", "HWIO", "NHWC"))
        return y + b.reshape(1, 1, 1, -1)

    def bn_relu(x, g, beta):
        mean = jnp.mean(x, axis=(0, 1, 2), keepdims=True)
        var = jnp.var(x, axis=(0, 1, 2), keepdims=True)
        y = (x - mean) / jnp.sqrt(var + EPS)
        y = y * g.reshape(1, 1, 1, -1) + beta.reshape(1, 1, 1, -1)
        return jnp.maximum(y, 0.0)

    x = jnp.transpose(x_nchw, (0, 2, 3, 1)).astype(jnp.float32)
    x = bn_relu(conv(x, p["w1"], p["b1"]), p["g1"], p["beta1"])
    x = bn_relu(conv(x, p["w2"], p["b2"]), p["g2"], p["beta2"])
    return jnp.transpose(x, (0, 3, 1, 2))


if __name__ == "__main__":
    key = jax.random.PRNGKey(0)
    kx, kp = jax.random.split(key)

    N, in_ch, out_ch, H, W = 2, 4, 8, 16, 16
    x = jax.random.normal(kx, (N, in_ch, H, W), jnp.float32)
    params = init_params(kp, in_ch, out_ch)

    prepped = prepare_params(params, W)          # hoisted weight prep (once per update)
    out = jax.block_until_ready(double_conv_forward(x, prepped))
    ref = jax.block_until_ready(_ref_double_conv(x, params))

    assert out.shape == (N, out_ch, H, W)
    # Tolerance loosened vs. the f32 reference because the MXU operands are bf16.
    np.testing.assert_allclose(np.asarray(out), np.asarray(ref),
                               atol=5e-2, rtol=5e-2)
    print("KERNEL_OK")
</pallas_src>

<mosaic_0001>
module attributes {stable_mosaic.version = 11 : i64} {
  func.func @kernel(%arg0: memref<2x16x64xf32, #tpu.memory_space<vmem>>, %arg1: memref<192x128xbf16, #tpu.memory_space<vmem>>, %arg2: memref<1x128xf32, #tpu.memory_space<vmem>>, %arg3: memref<1x128xf32, #tpu.memory_space<vmem>>, %arg4: memref<384x128xbf16, #tpu.memory_space<vmem>>, %arg5: memref<1x128xf32, #tpu.memory_space<vmem>>, %arg6: memref<1x128xf32, #tpu.memory_space<vmem>>, %arg7: memref<2x16x128xf32, #tpu.memory_space<vmem>>, %arg8: memref<2x16x192xf32, #tpu.memory_space<vmem>>, %arg9: memref<2x16x384xf32, #tpu.memory_space<vmem>>) attributes {dimension_semantics = [], scalar_prefetch = 0 : i64, scratch_operands = 2 : i64, tpu.core_type = #tpu.core_type<tc>} {
    %c0 = arith.constant 0 : index
    %c0_0 = arith.constant 0 : index
    %c0_1 = arith.constant 0 : index
    %0 = vector.load %arg0[%c0, %c0_0, %c0_1] : memref<2x16x64xf32, #tpu.memory_space<vmem>>, vector<2x16x64xf32>
    %cst = arith.constant 0.000000e+00 : f32
    %1 = vector.broadcast %cst : f32 to vector<2x1x64xf32>
    %c0_2 = arith.constant 0 : index
    %c0_3 = arith.constant 0 : index
    %c0_4 = arith.constant 0 : index
    %2 = vector.load %arg8[%c0_2, %c0_3, %c0_4] : memref<2x16x192xf32, #tpu.memory_space<vmem>>, vector<2x1x64xf32>
    tpu.vector_store %arg8[%c0_2, %c0_3, %c0_4], %1 {strides = array<i32>} : memref<2x16x192xf32, #tpu.memory_space<vmem>>, vector<2x1x64xf32>,
    %cst_5 = arith.constant 0.000000e+00 : f32
    %3 = vector.broadcast %cst_5 : f32 to vector<2x1x64xf32>
    %c0_6 = arith.constant 0 : index
    %c15 = arith.constant 15 : index
    %c128 = arith.constant 128 : index
    %4 = vector.load %arg8[%c0_6, %c15, %c128] : memref<2x16x192xf32, #tpu.memory_space<vmem>>, vector<2x1x64xf32>
    tpu.vector_store %arg8[%c0_6, %c15, %c128], %3 {strides = array<i32>} : memref<2x16x192xf32, #tpu.memory_space<vmem>>, vector<2x1x64xf32>,
    %5 = vector.extract_strided_slice %0 {offsets = [0, 0, 0], sizes = [2, 15, 64], strides = [1, 1, 1]} : vector<2x16x64xf32> to vector<2x15x64xf32>
    %c0_7 = arith.constant 0 : index
    %c1 = arith.constant 1 : index
    %c0_8 = arith.constant 0 : index
    %6 = vector.load %arg8[%c0_7, %c1, %c0_8] : memref<2x16x192xf32, #tpu.memory_space<vmem>>, vector<2x15x64xf32>
    tpu.vector_store %arg8[%c0_7, %c1, %c0_8], %5 {strides = array<i32>} : memref<2x16x192xf32, #tpu.memory_space<vmem>>, vector<2x15x64xf32>,
    %c0_9 = arith.constant 0 : index
    %c0_10 = arith.constant 0 : index
    %c64 = arith.constant 64 : index
    %7 = vector.load %arg8[%c0_9, %c0_10, %c64] : memref<2x16x192xf32, #tpu.memory_space<vmem>>, vector<2x16x64xf32>
    tpu.vector_store %arg8[%c0_9, %c0_10, %c64], %0 {strides = array<i32>} : memref<2x16x192xf32, #tpu.memory_space<vmem>>, vector<2x16x64xf32>,
    %8 = vector.extract_strided_slice %0 {offsets = [0, 1, 0], sizes = [2, 15, 64], strides = [1, 1, 1]} : vector<2x16x64xf32> to vector<2x15x64xf32>
    %c0_11 = arith.constant 0 : index
    %c0_12 = arith.constant 0 : index
    %c128_13 = arith.constant 128 : index
    %9 = vector.load %arg8[%c0_11, %c0_12, %c128_13] : memref<2x16x192xf32, #tpu.memory_space<vmem>>, vector<2x15x64xf32>
    tpu.vector_store %arg8[%c0_11, %c0_12, %c128_13], %8 {strides = array<i32>} : memref<2x16x192xf32, #tpu.memory_space<vmem>>, vector<2x15x64xf32>,
    %c0_14 = arith.constant 0 : index
    %c0_15 = arith.constant 0 : index
    %c0_16 = arith.constant 0 : index
    %10 = vector.load %arg8[%c0_14, %c0_15, %c0_16] : memref<2x16x192xf32, #tpu.memory_space<vmem>>, vector<2x16x192xf32>
    %11 = arith.truncf %10 : vector<2x16x192xf32> to vector<2x16x192xbf16>
    %12 = vector.shape_cast %11 : vector<2x16x192xbf16> to vector<32x192xbf16>
    %c0_17 = arith.constant 0 : index
    %c0_18 = arith.constant 0 : index
    %13 = vector.load %arg1[%c0_17, %c0_18] : memref<192x128xbf16, #tpu.memory_space<vmem>>, vector<192x128xbf16>
    %cst_19 = arith.constant dense<0.000000e+00> : vector<32x128xf32>
    %14 = tpu.matmul %12, %13, %cst_19 {dimension_numbers = #tpu.dot_dimension_numbers<[1], [0], [0], [1], [0, 0, 1, 1], [], []>} : vector<32x192xbf16>, vector<192x128xbf16>, vector<32x128xf32> -> vector<32x128xf32>
    %c0_20 = arith.constant 0 : index
    %c0_21 = arith.constant 0 : index
    %15 = vector.load %arg2[%c0_20, %c0_21] : memref<1x128xf32, #tpu.memory_space<vmem>>, vector<1x128xf32>
    %c0_22 = arith.constant 0 : index
    %c0_23 = arith.constant 0 : index
    %16 = vector.load %arg3[%c0_22, %c0_23] : memref<1x128xf32, #tpu.memory_space<vmem>>, vector<1x128xf32>
    %cst_24 = arith.constant dense<0.000000e+00> : vector<128xf32>
    %17 = vector.multi_reduction <add>, %14, %cst_24 [0] : vector<32x128xf32> to vector<128xf32>
    %18 = vector.shape_cast %17 : vector<128xf32> to vector<1x128xf32>
    %c8_i32 = arith.constant 8 : i32
    %19 = tpu.dynamic_rotate %18 by %c8_i32 dim 1 : vector<1x128xf32>, i32 -> vector<1x128xf32>
    %20 = arith.addf %18, %19 : vector<1x128xf32>
    %c16_i32 = arith.constant 16 : i32
    %21 = tpu.dynamic_rotate %20 by %c16_i32 dim 1 : vector<1x128xf32>, i32 -> vector<1x128xf32>
    %22 = arith.addf %20, %21 : vector<1x128xf32>
    %c32_i32 = arith.constant 32 : i32
    %23 = tpu.dynamic_rotate %22 by %c32_i32 dim 1 : vector<1x128xf32>, i32 -> vector<1x128xf32>
    %24 = arith.addf %22, %23 : vector<1x128xf32>
    %c64_i32 = arith.constant 64 : i32
    %25 = tpu.dynamic_rotate %24 by %c64_i32 dim 1 : vector<1x128xf32>, i32 -> vector<1x128xf32>
    %26 = arith.addf %24, %25 : vector<1x128xf32>
    %27 = arith.mulf %14, %14 : vector<32x128xf32>
    %cst_25 = arith.constant dense<0.000000e+00> : vector<128xf32>
    %28 = vector.multi_reduction <add>, %27, %cst_25 [0] : vector<32x128xf32> to vector<128xf32>
    %29 = vector.shape_cast %28 : vector<128xf32> to vector<1x128xf32>
    %c8_i32_26 = arith.constant 8 : i32
    %30 = tpu.dynamic_rotate %29 by %c8_i32_26 dim 1 : vector<1x128xf32>, i32 -> vector<1x128xf32>
    %31 = arith.addf %29, %30 : vector<1x128xf32>
    %c16_i32_27 = arith.constant 16 : i32
    %32 = tpu.dynamic_rotate %31 by %c16_i32_27 dim 1 : vector<1x128xf32>, i32 -> vector<1x128xf32>
    %33 = arith.addf %31, %32 : vector<1x128xf32>
    %c32_i32_28 = arith.constant 32 : i32
    %34 = tpu.dynamic_rotate %33 by %c32_i32_28 dim 1 : vector<1x128xf32>, i32 -> vector<1x128xf32>
    %35 = arith.addf %33, %34 : vector<1x128xf32>
    %c64_i32_29 = arith.constant 64 : i32
    %36 = tpu.dynamic_rotate %35 by %c64_i32_29 dim 1 : vector<1x128xf32>, i32 -> vector<1x128xf32>
    %37 = arith.addf %35, %36 : vector<1x128xf32>
    %cst_30 = arith.constant 0.001953125 : f32
    %38 = vector.broadcast %cst_30 : f32 to vector<1x128xf32>
    %39 = arith.mulf %26, %38 : vector<1x128xf32>
    %cst_31 = arith.constant 0.001953125 : f32
    %40 = vector.broadcast %cst_31 : f32 to vector<1x128xf32>
    %41 = arith.mulf %37, %40 : vector<1x128xf32>
    %42 = arith.mulf %39, %39 : vector<1x128xf32>
    %43 = arith.subf %41, %42 : vector<1x128xf32>
    %cst_32 = arith.constant 9.99999974E-6 : f32
    %44 = vector.broadcast %cst_32 : f32 to vector<1x128xf32>
    %45 = arith.addf %43, %44 : vector<1x128xf32>
    %46 = math.rsqrt %45 : vector<1x128xf32>
    %47 = arith.mulf %46, %15 : vector<1x128xf32>
    %48 = vector.broadcast %39 : vector<1x128xf32> to vector<32x128xf32>
    %49 = arith.subf %14, %48 : vector<32x128xf32>
    %50 = vector.broadcast %47 : vector<1x128xf32> to vector<32x128xf32>
    %51 = arith.mulf %49, %50 : vector<32x128xf32>
    %52 = vector.broadcast %16 : vector<1x128xf32> to vector<32x128xf32>
    %53 = arith.addf %51, %52 : vector<32x128xf32>
    %cst_33 = arith.constant 0.000000e+00 : f32
    %54 = vector.broadcast %cst_33 : f32 to vector<32x128xf32>
    %55 = arith.maximumf %53, %54 : vector<32x128xf32>
    %56 = vector.shape_cast %55 : vector<32x128xf32> to vector<2x16x128xf32>
    %cst_34 = arith.constant 0.000000e+00 : f32
    %57 = vector.broadcast %cst_34 : f32 to vector<2x1x128xf32>
    %c0_35 = arith.constant 0 : index
    %c0_36 = arith.constant 0 : index
    %c0_37 = arith.constant 0 : index
    %58 = vector.load %arg9[%c0_35, %c0_36, %c0_37] : memref<2x16x384xf32, #tpu.memory_space<vmem>>, vector<2x1x128xf32>
    tpu.vector_store %arg9[%c0_35, %c0_36, %c0_37], %57 {strides = array<i32>} : memref<2x16x384xf32, #tpu.memory_space<vmem>>, vector<2x1x128xf32>,
    %cst_38 = arith.constant 0.000000e+00 : f32
    %59 = vector.broadcast %cst_38 : f32 to vector<2x1x128xf32>
    %c0_39 = arith.constant 0 : index
    %c15_40 = arith.constant 15 : index
    %c256 = arith.constant 256 : index
    %60 = vector.load %arg9[%c0_39, %c15_40, %c256] : memref<2x16x384xf32, #tpu.memory_space<vmem>>, vector<2x1x128xf32>
    tpu.vector_store %arg9[%c0_39, %c15_40, %c256], %59 {strides = array<i32>} : memref<2x16x384xf32, #tpu.memory_space<vmem>>, vector<2x1x128xf32>,
    %61 = vector.extract_strided_slice %56 {offsets = [0, 0, 0], sizes = [2, 15, 128], strides = [1, 1, 1]} : vector<2x16x128xf32> to vector<2x15x128xf32>
    %c0_41 = arith.constant 0 : index
    %c1_42 = arith.constant 1 : index
    %c0_43 = arith.constant 0 : index
    %62 = vector.load %arg9[%c0_41, %c1_42, %c0_43] : memref<2x16x384xf32, #tpu.memory_space<vmem>>, vector<2x15x128xf32>
    tpu.vector_store %arg9[%c0_41, %c1_42, %c0_43], %61 {strides = array<i32>} : memref<2x16x384xf32, #tpu.memory_space<vmem>>, vector<2x15x128xf32>,
    %c0_44 = arith.constant 0 : index
    %c0_45 = arith.constant 0 : index
    %c128_46 = arith.constant 128 : index
    %63 = vector.load %arg9[%c0_44, %c0_45, %c128_46] : memref<2x16x384xf32, #tpu.memory_space<vmem>>, vector<2x16x128xf32>
    tpu.vector_store %arg9[%c0_44, %c0_45, %c128_46], %56 {strides = array<i32>} : memref<2x16x384xf32, #tpu.memory_space<vmem>>, vector<2x16x128xf32>,
    %64 = vector.extract_strided_slice %56 {offsets = [0, 1, 0], sizes = [2, 15, 128], strides = [1, 1, 1]} : vector<2x16x128xf32> to vector<2x15x128xf32>
    %c0_47 = arith.constant 0 : index
    %c0_48 = arith.constant 0 : index
    %c256_49 = arith.constant 256 : index
    %65 = vector.load %arg9[%c0_47, %c0_48, %c256_49] : memref<2x16x384xf32, #tpu.memory_space<vmem>>, vector<2x15x128xf32>
    tpu.vector_store %arg9[%c0_47, %c0_48, %c256_49], %64 {strides = array<i32>} : memref<2x16x384xf32, #tpu.memory_space<vmem>>, vector<2x15x128xf32>,
    %c0_50 = arith.constant 0 : index
    %c0_51 = arith.constant 0 : index
    %c0_52 = arith.constant 0 : index
    %66 = vector.load %arg9[%c0_50, %c0_51, %c0_52] : memref<2x16x384xf32, #tpu.memory_space<vmem>>, vector<2x16x384xf32>
    %67 = arith.truncf %66 : vector<2x16x384xf32> to vector<2x16x384xbf16>
    %68 = vector.shape_cast %67 : vector<2x16x384xbf16> to vector<32x384xbf16>
    %c0_53 = arith.constant 0 : index
    %c0_54 = arith.constant 0 : index
    %69 = vector.load %arg4[%c0_53, %c0_54] : memref<384x128xbf16, #tpu.memory_space<vmem>>, vector<384x128xbf16>
    %cst_55 = arith.constant dense<0.000000e+00> : vector<32x128xf32>
    %70 = tpu.matmul %68, %69, %cst_55 {dimension_numbers = #tpu.dot_dimension_numbers<[1], [0], [0], [1], [0, 0, 1, 1], [], []>} : vector<32x384xbf16>, vector<384x128xbf16>, vector<32x128xf32> -> vector<32x128xf32>
    %c0_56 = arith.constant 0 : index
    %c0_57 = arith.constant 0 : index
    %71 = vector.load %arg5[%c0_56, %c0_57] : memref<1x128xf32, #tpu.memory_space<vmem>>, vector<1x128xf32>
    %c0_58 = arith.constant 0 : index
    %c0_59 = arith.constant 0 : index
    %72 = vector.load %arg6[%c0_58, %c0_59] : memref<1x128xf32, #tpu.memory_space<vmem>>, vector<1x128xf32>
    %cst_60 = arith.constant dense<0.000000e+00> : vector<128xf32>
    %73 = vector.multi_reduction <add>, %70, %cst_60 [0] : vector<32x128xf32> to vector<128xf32>
    %74 = vector.shape_cast %73 : vector<128xf32> to vector<1x128xf32>
    %c8_i32_61 = arith.constant 8 : i32
    %75 = tpu.dynamic_rotate %74 by %c8_i32_61 dim 1 : vector<1x128xf32>, i32 -> vector<1x128xf32>
    %76 = arith.addf %74, %75 : vector<1x128xf32>
    %c16_i32_62 = arith.constant 16 : i32
    %77 = tpu.dynamic_rotate %76 by %c16_i32_62 dim 1 : vector<1x128xf32>, i32 -> vector<1x128xf32>
    %78 = arith.addf %76, %77 : vector<1x128xf32>
    %c32_i32_63 = arith.constant 32 : i32
    %79 = tpu.dynamic_rotate %78 by %c32_i32_63 dim 1 : vector<1x128xf32>, i32 -> vector<1x128xf32>
    %80 = arith.addf %78, %79 : vector<1x128xf32>
    %c64_i32_64 = arith.constant 64 : i32
    %81 = tpu.dynamic_rotate %80 by %c64_i32_64 dim 1 : vector<1x128xf32>, i32 -> vector<1x128xf32>
    %82 = arith.addf %80, %81 : vector<1x128xf32>
    %83 = arith.mulf %70, %70 : vector<32x128xf32>
    %cst_65 = arith.constant dense<0.000000e+00> : vector<128xf32>
    %84 = vector.multi_reduction <add>, %83, %cst_65 [0] : vector<32x128xf32> to vector<128xf32>
    %85 = vector.shape_cast %84 : vector<128xf32> to vector<1x128xf32>
    %c8_i32_66 = arith.constant 8 : i32
    %86 = tpu.dynamic_rotate %85 by %c8_i32_66 dim 1 : vector<1x128xf32>, i32 -> vector<1x128xf32>
    %87 = arith.addf %85, %86 : vector<1x128xf32>
    %c16_i32_67 = arith.constant 16 : i32
    %88 = tpu.dynamic_rotate %87 by %c16_i32_67 dim 1 : vector<1x128xf32>, i32 -> vector<1x128xf32>
    %89 = arith.addf %87, %88 : vector<1x128xf32>
    %c32_i32_68 = arith.constant 32 : i32
    %90 = tpu.dynamic_rotate %89 by %c32_i32_68 dim 1 : vector<1x128xf32>, i32 -> vector<1x128xf32>
    %91 = arith.addf %89, %90 : vector<1x128xf32>
    %c64_i32_69 = arith.constant 64 : i32
    %92 = tpu.dynamic_rotate %91 by %c64_i32_69 dim 1 : vector<1x128xf32>, i32 -> vector<1x128xf32>
    %93 = arith.addf %91, %92 : vector<1x128xf32>
    %cst_70 = arith.constant 0.001953125 : f32
    %94 = vector.broadcast %cst_70 : f32 to vector<1x128xf32>
    %95 = arith.mulf %82, %94 : vector<1x128xf32>
    %cst_71 = arith.constant 0.001953125 : f32
    %96 = vector.broadcast %cst_71 : f32 to vector<1x128xf32>
    %97 = arith.mulf %93, %96 : vector<1x128xf32>
    %98 = arith.mulf %95, %95 : vector<1x128xf32>
    %99 = arith.subf %97, %98 : vector<1x128xf32>
    %cst_72 = arith.constant 9.99999974E-6 : f32
    %100 = vector.broadcast %cst_72 : f32 to vector<1x128xf32>
    %101 = arith.addf %99, %100 : vector<1x128xf32>
    %102 = math.rsqrt %101 : vector<1x128xf32>
    %103 = arith.mulf %102, %71 : vector<1x128xf32>
    %104 = vector.broadcast %95 : vector<1x128xf32> to vector<32x128xf32>
    %105 = arith.subf %70, %104 : vector<32x128xf32>
    %106 = vector.broadcast %103 : vector<1x128xf32> to vector<32x128xf32>
    %107 = arith.mulf %105, %106 : vector<32x128xf32>
    %108 = vector.broadcast %72 : vector<1x128xf32> to vector<32x128xf32>
    %109 = arith.addf %107, %108 : vector<32x128xf32>
    %cst_73 = arith.constant 0.000000e+00 : f32
    %110 = vector.broadcast %cst_73 : f32 to vector<32x128xf32>
    %111 = arith.maximumf %109, %110 : vector<32x128xf32>
    %112 = vector.shape_cast %111 : vector<32x128xf32> to vector<2x16x128xf32>
    %c0_74 = arith.constant 0 : index
    %c0_75 = arith.constant 0 : index
    %c0_76 = arith.constant 0 : index
    %113 = vector.load %arg7[%c0_74, %c0_75, %c0_76] : memref<2x16x128xf32, #tpu.memory_space<vmem>>, vector<2x16x128xf32>
    tpu.vector_store %arg7[%c0_74, %c0_75, %c0_76], %112 {strides = array<i32>} : memref<2x16x128xf32, #tpu.memory_space<vmem>>, vector<2x16x128xf32>,
    return
  }
}

</mosaic_0001>

<llo_original>
// kernel: double_conv_forward.1
$region0: #{double_conv_forward.1}
  #allocation0 [shape = 'u32[]', space=smem, size = 0x4, offset = 0x4, fixed_abs, tag = 'smem constant byte address 0x4 - core index']
  #allocation1 [shape = 'u32[72,128]{1,0:T(1,128)}', space=vmem, size = 0x9000, scoped, tag = 'internal scratch']
  #allocation2 [shape = 'f32[2,16,192]{2,1,0:T(8,128)}', space=vmem, size = 0x8000, scoped, tag = 'scratch operand']
  #allocation3 [shape = 'f32[2,16,384]{2,1,0:T(8,128)}', space=vmem, size = 0xc000, scoped, tag = 'scratch operand']
  %s0 = inlined_call_operand.vmem [shape: f32[2,16,64], index: 0, kind: input, shape index: {}]
  %s1 = inlined_call_operand.vmem [shape: bf16[192,128], index: 1, kind: input, shape index: {}]
  %s2 = inlined_call_operand.vmem [shape: f32[1,128], index: 2, kind: input, shape index: {}]
  %s3 = inlined_call_operand.vmem [shape: f32[1,128], index: 3, kind: input, shape index: {}]
  %s4 = inlined_call_operand.vmem [shape: bf16[384,128], index: 4, kind: input, shape index: {}]
  %s5 = inlined_call_operand.vmem [shape: f32[1,128], index: 5, kind: input, shape index: {}]
  %s6 = inlined_call_operand.vmem [shape: f32[1,128], index: 6, kind: input, shape index: {}]
  %s7 = inlined_call_operand.vmem [shape: f32[2,16,128], index: 7, kind: output, shape index: {}]
  %s8 = sld [smem:[#allocation0]]
  $region38: #{double_conv_forward.1} parent=0
    _
  %s10 = ssub.s32 1, %s8
  %s11 = scalar_select 0, %s10, %s8
  // Predicated region
  $region2: #{double_conv_forward.1} parent=0 // pred_check
    _
  $region3: #{double_conv_forward.1} parent=0 // pred_check_branch
    %13 = sbr.rel (0) target = $region5
  $region4: #{double_conv_forward.1} parent=0 // pred_region
    _
  $region5: #{double_conv_forward.1} parent=0 // pred_fallthru
    _
  // Predicated region
  $region6: #{double_conv_forward.1} parent=0 // pred_check
    _
  $region7: #{double_conv_forward.1} parent=0 // pred_check_branch
    %15 = sbr.rel (0) target = $region9
  $region8: #{double_conv_forward.1} parent=0 // pred_region
    _
  $region9: #{double_conv_forward.1} parent=0 // pred_fallthru
    _
  // Predicated region
  $region10: #{double_conv_forward.1} parent=0 // pred_check
    _
  $region11: #{double_conv_forward.1} parent=0 // pred_check_branch
    %17 = sbr.rel (0) target = $region13
  $region12: #{double_conv_forward.1} parent=0 // pred_region
    _
  $region13: #{double_conv_forward.1} parent=0 // pred_fallthru
    _
  // Predicated region
  $region14: #{double_conv_forward.1} parent=0 // pred_check
    _
  $region15: #{double_conv_forward.1} parent=0 // pred_check_branch
    %19 = sbr.rel (0) target = $region17
  $region16: #{double_conv_forward.1} parent=0 // pred_region
    _
  $region17: #{double_conv_forward.1} parent=0 // pred_fallthru
    _
  // Predicated region
  $region18: #{double_conv_forward.1} parent=0 // pred_check
    _
  $region19: #{double_conv_forward.1} parent=0 // pred_check_branch
    %21 = sbr.rel (0) target = $region21
  $region20: #{double_conv_forward.1} parent=0 // pred_region
    _
  $region21: #{double_conv_forward.1} parent=0 // pred_fallthru
    _
  // Predicated region
  $region22: #{double_conv_forward.1} parent=0 // pred_check
    _
  $region23: #{double_conv_forward.1} parent=0 // pred_check_branch
    %23 = sbr.rel (0) target = $region25
  $region24: #{double_conv_forward.1} parent=0 // pred_region
    _
  $region25: #{double_conv_forward.1} parent=0 // pred_fallthru
    _
  // Predicated region
  $region26: #{double_conv_forward.1} parent=0 // pred_check
    _
  $region27: #{double_conv_forward.1} parent=0 // pred_check_branch
    %25 = sbr.rel (0) target = $region29
  $region28: #{double_conv_forward.1} parent=0 // pred_region
    _
  $region29: #{double_conv_forward.1} parent=0 // pred_fallthru
    _
  %v27 = vld [vmem:[%s0] sm:$0xff]
  %v28 = vld [vmem:[%s0 + $0x8] sm:$0xff]
  %v29 = vld [vmem:[%s0 + $0x10] sm:$0xff]
  %v30 = vld [vmem:[%s0 + $0x18] sm:$0xff]
  %vm31 = vcmask 516096
  %32 = vst.msk [vmem:[#allocation2] sm:$0x1] %vm31, 0.0
  %33 = vst.msk [vmem:[#allocation2 + $0x20] sm:$0x1] %vm31, 0.0
  %34 = vst.msk [vmem:[#allocation2 + $0x1f] sm:$0x1] %vm31, 0.0
  %35 = vst.msk [vmem:[#allocation2 + $0x3f] sm:$0x1] %vm31, 0.0
  %vm40 = vcmask 1040384
  %v41 = vrot.slane %v27, 7
  %v42 = vrot.slane %v28, 7
  %v43 = vsel %vm40, %v41, %v42
  %v44 = vrot.slane %v29, 7
  %v45 = vrot.slane %v30, 7
  %v46 = vsel %vm40, %v44, %v45
  %vm51 = vcmask 523265
  %52 = vst.msk [vmem:[#allocation2] sm:$0xfe] %vm51, %v41
  %vm53 = vcmask 523264
  %54 = vst.msk [vmem:[#allocation2 + $0x10] sm:$0xff] %vm53, %v43
  %55 = vst.msk [vmem:[#allocation2 + $0x20] sm:$0xfe] %vm51, %v44
  %56 = vst.msk [vmem:[#allocation2 + $0x30] sm:$0xff] %vm53, %v46
  %57 = vrot.lane.b32.xlu0 %v27, 64
  %v58 = vpop.permute.xlu0 %57
  %59 = vrot.lane.b32.xlu0 %v28, 64
  %v60 = vpop.permute.xlu0 %59
  %61 = vrot.lane.b32.xlu0 %v29, 64
  %v62 = vpop.permute.xlu0 %61
  %63 = vrot.lane.b32.xlu0 %v30, 64
  %v64 = vpop.permute.xlu0 %63
  %vm69 = vcmask 1048064
  %70 = vst.msk [vmem:[#allocation2] sm:$0xff] %vm69, %v58
  %71 = vst.msk [vmem:[#allocation2 + $0x10] sm:$0xff] %vm69, %v60
  %72 = vst.msk [vmem:[#allocation2 + $0x20] sm:$0xff] %vm69, %v62
  %73 = vst.msk [vmem:[#allocation2 + $0x30] sm:$0xff] %vm69, %v64
  %vm74 = vcmask 1046528
  %v75 = vrot.slane %v27, 1
  %v76 = vrot.slane %v28, 1
  %v77 = vsel %vm74, %v75, %v76
  %v78 = vrot.slane %v29, 1
  %v79 = vrot.slane %v30, 1
  %v80 = vsel %vm74, %v78, %v79
  %85 = vst.msk [vmem:[#allocation2 + $0x8] sm:$0xff] %vm53, %v77
  %vm86 = vcmask 522240
  %87 = vst.msk [vmem:[#allocation2 + $0x18] sm:$0x7f] %vm86, %v76
  %88 = vst.msk [vmem:[#allocation2 + $0x28] sm:$0xff] %vm53, %v80
  %89 = vst.msk [vmem:[#allocation2 + $0x38] sm:$0x7f] %vm86, %v79
  %v90 = vld [vmem:[#allocation2] sm:$0xff]
  %v91 = vld [vmem:[#allocation2 + $0x8] sm:$0xff]
  %v92 = vld [vmem:[#allocation2 + $0x10] sm:$0xff]
  %v93 = vld [vmem:[#allocation2 + $0x18] sm:$0xff]
  %v94 = vld [vmem:[#allocation2 + $0x20] sm:$0xff]
  %v95 = vld [vmem:[#allocation2 + $0x28] sm:$0xff]
  %v96 = vld [vmem:[#allocation2 + $0x30] sm:$0xff]
  %v97 = vld [vmem:[#allocation2 + $0x38] sm:$0xff]
  %v98 = vpack.c.bf16 %v91, %v90
  %v99 = vpack.c.bf16 %v93, %v92
  %v100 = vpack.c.bf16 %v95, %v94
  %v101 = vpack.c.bf16 %v97, %v96
  %v102 = vld [vmem:[%s1] sm:$0xf]
  %v103 = vld [vmem:[%s1 + $0x4] sm:$0xf]
  %v104 = vld [vmem:[%s1 + $0x8] sm:$0xf]
  %v105 = vld [vmem:[%s1 + $0xc] sm:$0xf]
  %v106 = vld [vmem:[%s1 + $0x10] sm:$0xf]
  %v107 = vld [vmem:[%s1 + $0x14] sm:$0xf]
  %v108 = vld [vmem:[%s1 + $0x18] sm:$0xf]
  %v109 = vld [vmem:[%s1 + $0x1c] sm:$0xf]
  %v110 = vld [vmem:[%s1 + $0x20] sm:$0xf]
  %v111 = vld [vmem:[%s1 + $0x24] sm:$0xf]
  %v112 = vld [vmem:[%s1 + $0x28] sm:$0xf]
  %v113 = vld [vmem:[%s1 + $0x2c] sm:$0xf]
  %v114 = vld [vmem:[%s1 + $0x30] sm:$0xf]
  %v115 = vld [vmem:[%s1 + $0x34] sm:$0xf]
  %v116 = vld [vmem:[%s1 + $0x38] sm:$0xf]
  %v117 = vld [vmem:[%s1 + $0x3c] sm:$0xf]
  %v118 = vld [vmem:[%s1 + $0x40] sm:$0xf]
  %v119 = vld [vmem:[%s1 + $0x44] sm:$0xf]
  %v120 = vld [vmem:[%s1 + $0x48] sm:$0xf]
  %v121 = vld [vmem:[%s1 + $0x4c] sm:$0xf]
  %v122 = vld [vmem:[%s1 + $0x50] sm:$0xf]
  %v123 = vld [vmem:[%s1 + $0x54] sm:$0xf]
  %v124 = vld [vmem:[%s1 + $0x58] sm:$0xf]
  %v125 = vld [vmem:[%s1 + $0x5c] sm:$0xf]
  %v130 = vunpack.c.l.b16 %v98
  %v131 = vunpack.c.h.b16 %v98
  %v132 = vunpack.c.l.b16 %v99
  %v133 = vunpack.c.h.b16 %v99
  %v134 = vunpack.c.l.b16 %v100
  %v135 = vunpack.c.h.b16 %v100
  %v136 = vunpack.c.l.b16 %v101
  %v137 = vunpack.c.h.b16 %v101
  %v138 = vpack.c.b16 %v132, %v130
  %v139 = vpack.c.b16 %v133, %v131
  %v140 = vpack.c.b16 %v136, %v134
  %v141 = vpack.c.b16 %v137, %v135
  %v168 = vunpack.c.l.b16 %v102
  %v169 = vunpack.c.l.b16 %v103
  %v170 = vunpack.c.l.b16 %v104
  %v171 = vunpack.c.l.b16 %v105
  %v172 = vunpack.c.l.b16 %v106
  %v173 = vunpack.c.l.b16 %v107
  %v174 = vunpack.c.l.b16 %v108
  %v175 = vunpack.c.l.b16 %v109
  %v176 = vunpack.c.l.b16 %v110
  %v177 = vunpack.c.l.b16 %v111
  %v178 = vunpack.c.l.b16 %v112
  %v179 = vunpack.c.l.b16 %v113
  %v180 = vunpack.c.l.b16 %v114
  %v181 = vunpack.c.l.b16 %v115
  %v182 = vunpack.c.l.b16 %v116
  %v183 = vunpack.c.l.b16 %v117
  %v184 = vunpack.c.l.b16 %v118
  %v185 = vunpack.c.l.b16 %v119
  %v186 = vunpack.c.l.b16 %v120
  %v187 = vunpack.c.l.b16 %v121
  %v188 = vunpack.c.l.b16 %v122
  %v189 = vunpack.c.l.b16 %v123
  %v190 = vunpack.c.l.b16 %v124
  %v191 = vunpack.c.l.b16 %v125
  %v192 = vpack.c.b16 %v169, %v168
  %v193 = vpack.c.b16 %v171, %v170
  %v194 = vpack.c.b16 %v173, %v172
  %v195 = vpack.c.b16 %v175, %v174
  %v196 = vpack.c.b16 %v177, %v176
  %v197 = vpack.c.b16 %v179, %v178
  %v198 = vpack.c.b16 %v181, %v180
  %v199 = vpack.c.b16 %v183, %v182
  %v200 = vpack.c.b16 %v185, %v184
  %v201 = vpack.c.b16 %v187, %v186
  %v202 = vpack.c.b16 %v189, %v188
  %v203 = vpack.c.b16 %v191, %v190
  %v217 = vsel %vm53, %v139, 0
  %v220 = vsel %vm53, %v141, 0
  %222 = vmatpush.bf16.msra.mxu0 %v199
  %223 = vmatpush.bf16.msra.mxu0 %v198
  %224 = vmatpush.bf16.msra.mxu0 %v197
  %225 = vmatpush.bf16.msra.mxu0 %v196
  %226 = vmatpush.bf16.msra.mxu0 %v195
  %227 = vmatpush.bf16.msra.mxu0 %v194
  %228 = vmatpush.bf16.msra.mxu0 %v193
  %229 = vmatpush.bf16.msra.mxu0 %v192
  %230 = vmatmul.bf16.gmra.mxu0 %v138
  %v231 = vpop.f32.mrf.mxu0
  %v232 = vadd.f32 0.0, %v231
  %v233 = vpop.f32.mrf.mxu0
  %v234 = vadd.f32 0.0, %v233
  %235 = vmatmul.bf16.gmra.mxu0 %v140
  %v236 = vpop.f32.mrf.mxu0
  %v237 = vadd.f32 0.0, %v236
  %v238 = vpop.f32.mrf.mxu0
  %v239 = vadd.f32 0.0, %v238
  %240 = vdwg.mxu0
  %241 = vmatpush.bf16.msra.mxu0 0
  %242 = vmatpush.bf16.msra.mxu0 0
  %243 = vmatpush.bf16.msra.mxu0 0
  %244 = vmatpush.bf16.msra.mxu0 0
  %245 = vmatpush.bf16.msra.mxu0 %v203
  %246 = vmatpush.bf16.msra.mxu0 %v202
  %247 = vmatpush.bf16.msra.mxu0 %v201
  %248 = vmatpush.bf16.msra.mxu0 %v200
  %249 = vmatmul.bf16.gmra.mxu0 %v217
  %v250 = vpop.f32.mrf.mxu0
  %v251 = vadd.f32 %v232, %v250
  %v252 = vpop.f32.mrf.mxu0
  %v253 = vadd.f32 %v234, %v252
  %254 = vmatmul.bf16.gmra.mxu0 %v220
  %v255 = vpop.f32.mrf.mxu0
  %v256 = vadd.f32 %v237, %v255
  %v257 = vpop.f32.mrf.mxu0
  %v258 = vadd.f32 %v239, %v257
  %259 = vdwg.mxu0
  %v260 = vld [vmem:[%s2] sm:$0x1]
  %v261 = vld [vmem:[%s3] sm:$0x1]
  %v262 = vadd.f32 %v251, %v253
  %v263 = vadd.f32 %v262, %v256
  %v264 = vadd.f32 %v263, %v258
  %v265 = vrot.slane %v264, 4
  %v266 = vadd.f32 %v264, %v265
  %v267 = vrot.slane %v266, 2
  %v268 = vadd.f32 %v266, %v267
  %v269 = vrot.slane %v268, 1
  %v270 = vadd.f32 %v268, %v269
  %271 = vrot.lane.b32.xlu0 %v270, 8
  %v272 = vpop.permute.xlu0 %271
  %v273 = vadd.f32 %v270, %v272
  %274 = vrot.lane.b32.xlu0 %v273, 16
  %v275 = vpop.permute.xlu0 %274
  %v276 = vadd.f32 %v273, %v275
  %277 = vrot.lane.b32.xlu0 %v276, 32
  %v278 = vpop.permute.xlu0 %277
  %v279 = vadd.f32 %v276, %v278
  %280 = vrot.lane.b32.xlu0 %v279, 64
  %v281 = vpop.permute.xlu0 %280
  %v282 = vadd.f32 %v279, %v281
  %v283 = vmul.f32 %v251, %v251
  %v284 = vmul.f32 %v253, %v253
  %v285 = vmul.f32 %v256, %v256
  %v286 = vmul.f32 %v258, %v258
  %v287 = vadd.f32 %v283, %v284
  %v288 = vadd.f32 %v287, %v285
  %v289 = vadd.f32 %v288, %v286
  %v290 = vrot.slane %v289, 4
  %v291 = vadd.f32 %v289, %v290
  %v292 = vrot.slane %v291, 2
  %v293 = vadd.f32 %v291, %v292
  %v294 = vrot.slane %v293, 1
  %v295 = vadd.f32 %v293, %v294
  %296 = vrot.lane.b32.xlu0 %v295, 8
  %v297 = vpop.permute.xlu0 %296
  %v298 = vadd.f32 %v295, %v297
  %299 = vrot.lane.b32.xlu0 %v298, 16
  %v300 = vpop.permute.xlu0 %299
  %v301 = vadd.f32 %v298, %v300
  %302 = vrot.lane.b32.xlu0 %v301, 32
  %v303 = vpop.permute.xlu0 %302
  %v304 = vadd.f32 %v301, %v303
  %305 = vrot.lane.b32.xlu0 %v304, 64
  %v306 = vpop.permute.xlu0 %305
  %v307 = vadd.f32 %v304, %v306
  %v308 = vmul.f32 %v282, 0.001953125
  %v309 = vmul.f32 %v307, 0.001953125
  %v310 = vmul.f32 %v308, %v308
  %v311 = vsub.f32 %v309, %v310
  %v312 = vadd.f32 %v311, 1e-05
  %v313 = vrsqrt.pop %v312
  %v314 = vmul.f32 %v313, %v312
  %v315 = vmul.f32 %v314, %v313
  %v316 = vmul.f32 0.5, %v315
  %v317 = vsub.f32 1.5, %v316
  %v318 = vmul.f32 %v313, %v317
  %vm319 = vweird.f32 %v312
  %vm320 = vweird.f32 %v313
  %vm321 = vmor %vm319, %vm320
  %v322 = vsel %vm321, %v313, %v318
  %v323 = vmul.f32 %v322, %v260
  %v324 = vperm.slane %v308, 0
  %v325 = vsub.f32 %v251, %v324
  %v326 = vsub.f32 %v253, %v324
  %v327 = vsub.f32 %v256, %v324
  %v328 = vsub.f32 %v258, %v324
  %v329 = vperm.slane %v323, 0
  %v330 = vmul.f32 %v325, %v329
  %v331 = vmul.f32 %v326, %v329
  %v332 = vmul.f32 %v327, %v329
  %v333 = vmul.f32 %v328, %v329
  %v335 = vperm.slane %v261, 0
  %v337 = vadd.f32 %v330, %v335
  %v338 = vadd.f32 %v331, %v335
  %v339 = vadd.f32 %v332, %v335
  %v340 = vadd.f32 %v333, %v335
  %v341 = vmax.f32 %v337, 0.0
  %v342 = vmax.f32 %v338, 0.0
  %v343 = vmax.f32 %v339, 0.0
  %v344 = vmax.f32 %v340, 0.0
  %345 = vst [vmem:[#allocation3] sm:$0x1] 0.0
  %346 = vst [vmem:[#allocation3 + $0x30] sm:$0x1] 0.0
  %347 = vst [vmem:[#allocation3 + $0x2f] sm:$0x1] 0.0
  %348 = vst [vmem:[#allocation3 + $0x5f] sm:$0x1] 0.0
  %v353 = vrot.slane %v341, 7
  %v354 = vrot.slane %v342, 7
  %v355 = vsel %vm40, %v353, %v354
  %v356 = vrot.slane %v343, 7
  %v357 = vrot.slane %v344, 7
  %v358 = vsel %vm40, %v356, %v357
  %363 = vst [vmem:[#allocation3] sm:$0xfe] %v353
  %364 = vst [vmem:[#allocation3 + $0x18] sm:$0xff] %v355
  %365 = vst [vmem:[#allocation3 + $0x30] sm:$0xfe] %v356
  %366 = vst [vmem:[#allocation3 + $0x48] sm:$0xff] %v358
  %367 = vst [vmem:[#allocation3 + $0x8] sm:$0xff] %v341
  %368 = vst [vmem:[#allocation3 + $0x20] sm:$0xff] %v342
  %369 = vst [vmem:[#allocation3 + $0x38] sm:$0xff] %v343
  %370 = vst [vmem:[#allocation3 + $0x50] sm:$0xff] %v344
  %v371 = vrot.slane %v341, 1
  %v372 = vrot.slane %v342, 1
  %v373 = vsel %vm74, %v371, %v372
  %v374 = vrot.slane %v343, 1
  %v375 = vrot.slane %v344, 1
  %v376 = vsel %vm74, %v374, %v375
  %381 = vst [vmem:[#allocation3 + $0x10] sm:$0xff] %v373
  %382 = vst [vmem:[#allocation3 + $0x28] sm:$0x7f] %v372
  %383 = vst [vmem:[#allocation3 + $0x40] sm:$0xff] %v376
  %384 = vst [vmem:[#allocation3 + $0x58] sm:$0x7f] %v375
  %v385 = vld [vmem:[#allocation3] sm:$0xff]
  %v386 = vld [vmem:[#allocation3 + $0x8] sm:$0xff]
  %v387 = vld [vmem:[#allocation3 + $0x10] sm:$0xff]
  %v388 = vld [vmem:[#allocation3 + $0x18] sm:$0xff]
  %v389 = vld [vmem:[#allocation3 + $0x20] sm:$0xff]
  %v390 = vld [vmem:[#allocation3 + $0x28] sm:$0xff]
  %v391 = vld [vmem:[#allocation3 + $0x30] sm:$0xff]
  %v392 = vld [vmem:[#allocation3 + $0x38] sm:$0xff]
  %v393 = vld [vmem:[#allocation3 + $0x40] sm:$0xff]
  %v394 = vld [vmem:[#allocation3 + $0x48] sm:$0xff]
  %v395 = vld [vmem:[#allocation3 + $0x50] sm:$0xff]
  %v396 = vld [vmem:[#allocation3 + $0x58] sm:$0xff]
  %v397 = vpack.c.bf16 %v386, %v385
  %v398 = vpack.c.bf16 %v387, %v387
  %v399 = vpack.c.bf16 %v389, %v388
  %v400 = vpack.c.bf16 %v390, %v390
  %v401 = vpack.c.bf16 %v392, %v391
  %v402 = vpack.c.bf16 %v393, %v393
  %v403 = vpack.c.bf16 %v395, %v394
  %v404 = vpack.c.bf16 %v396, %v396
  %v405 = vld [vmem:[%s4] sm:$0xf]
  %v406 = vld [vmem:[%s4 + $0x4] sm:$0xf]
  %v407 = vld [vmem:[%s4 + $0x8] sm:$0xf]
  %v408 = vld [vmem:[%s4 + $0xc] sm:$0xf]
  %v409 = vld [vmem:[%s4 + $0x10] sm:$0xf]
  %v410 = vld [vmem:[%s4 + $0x14] sm:$0xf]
  %v411 = vld [vmem:[%s4 + $0x18] sm:$0xf]
  %v412 = vld [vmem:[%s4 + $0x1c] sm:$0xf]
  %v413 = vld [vmem:[%s4 + $0x20] sm:$0xf]
  %v414 = vld [vmem:[%s4 + $0x24] sm:$0xf]
  %v415 = vld [vmem:[%s4 + $0x28] sm:$0xf]
  %v416 = vld [vmem:[%s4 + $0x2c] sm:$0xf]
  %v417 = vld [vmem:[%s4 + $0x30] sm:$0xf]
  %v418 = vld [vmem:[%s4 + $0x34] sm:$0xf]
  %v419 = vld [vmem:[%s4 + $0x38] sm:$0xf]
  %v420 = vld [vmem:[%s4 + $0x3c] sm:$0xf]
  %v421 = vld [vmem:[%s4 + $0x40] sm:$0xf]
  %v422 = vld [vmem:[%s4 + $0x44] sm:$0xf]
  %v423 = vld [vmem:[%s4 + $0x48] sm:$0xf]
  %v424 = vld [vmem:[%s4 + $0x4c] sm:$0xf]
  %v425 = vld [vmem:[%s4 + $0x50] sm:$0xf]
  %v426 = vld [vmem:[%s4 + $0x54] sm:$0xf]
  %v427 = vld [vmem:[%s4 + $0x58] sm:$0xf]
  %v428 = vld [vmem:[%s4 + $0x5c] sm:$0xf]
  %v429 = vld [vmem:[%s4 + $0x60] sm:$0xf]
  %v430 = vld [vmem:[%s4 + $0x64] sm:$0xf]
  %v431 = vld [vmem:[%s4 + $0x68] sm:$0xf]
  %v432 = vld [vmem:[%s4 + $0x6c] sm:$0xf]
  %v433 = vld [vmem:[%s4 + $0x70] sm:$0xf]
  %v434 = vld [vmem:[%s4 + $0x74] sm:$0xf]
  %v435 = vld [vmem:[%s4 + $0x78] sm:$0xf]
  %v436 = vld [vmem:[%s4 + $0x7c] sm:$0xf]
  %v437 = vld [vmem:[%s4 + $0x80] sm:$0xf]
  %v438 = vld [vmem:[%s4 + $0x84] sm:$0xf]
  %v439 = vld [vmem:[%s4 + $0x88] sm:$0xf]
  %v440 = vld [vmem:[%s4 + $0x8c] sm:$0xf]
  %v441 = vld [vmem:[%s4 + $0x90] sm:$0xf]
  %v442 = vld [vmem:[%s4 + $0x94] sm:$0xf]
  %v443 = vld [vmem:[%s4 + $0x98] sm:$0xf]
  %v444 = vld [vmem:[%s4 + $0x9c] sm:$0xf]
  %v445 = vld [vmem:[%s4 + $0xa0] sm:$0xf]
  %v446 = vld [vmem:[%s4 + $0xa4] sm:$0xf]
  %v447 = vld [vmem:[%s4 + $0xa8] sm:$0xf]
  %v448 = vld [vmem:[%s4 + $0xac] sm:$0xf]
  %v449 = vld [vmem:[%s4 + $0xb0] sm:$0xf]
  %v450 = vld [vmem:[%s4 + $0xb4] sm:$0xf]
  %v451 = vld [vmem:[%s4 + $0xb8] sm:$0xf]
  %v452 = vld [vmem:[%s4 + $0xbc] sm:$0xf]
  %v461 = vunpack.c.l.b16 %v397
  %v462 = vunpack.c.h.b16 %v397
  %v463 = vunpack.c.l.b16 %v398
  %v464 = vunpack.c.l.b16 %v399
  %v465 = vunpack.c.h.b16 %v399
  %v466 = vunpack.c.l.b16 %v400
  %v467 = vunpack.c.l.b16 %v401
  %v468 = vunpack.c.h.b16 %v401
  %v469 = vunpack.c.l.b16 %v402
  %v470 = vunpack.c.l.b16 %v403
  %v471 = vunpack.c.h.b16 %v403
  %v472 = vunpack.c.l.b16 %v404
  %v473 = vpack.c.b16 %v464, %v461
  %v474 = vpack.c.b16 %v465, %v462
  %v475 = vpack.c.b16 %v466, %v463
  %v476 = vpack.c.b16 %v470, %v467
  %v477 = vpack.c.b16 %v471, %v468
  %v478 = vpack.c.b16 %v472, %v469
  %v533 = vunpack.c.l.b16 %v405
  %v534 = vunpack.c.l.b16 %v406
  %v535 = vunpack.c.l.b16 %v407
  %v536 = vunpack.c.l.b16 %v408
  %v537 = vunpack.c.l.b16 %v409
  %v538 = vunpack.c.l.b16 %v410
  %v539 = vunpack.c.l.b16 %v411
  %v540 = vunpack.c.l.b16 %v412
  %v541 = vunpack.c.l.b16 %v413
  %v542 = vunpack.c.l.b16 %v414
  %v543 = vunpack.c.l.b16 %v415
  %v544 = vunpack.c.l.b16 %v416
  %v545 = vunpack.c.l.b16 %v417
  %v546 = vunpack.c.l.b16 %v418
  %v547 = vunpack.c.l.b16 %v419
  %v548 = vunpack.c.l.b16 %v420
  %v549 = vunpack.c.l.b16 %v421
  %v550 = vunpack.c.l.b16 %v422
  %v551 = vunpack.c.l.b16 %v423
  %v552 = vunpack.c.l.b16 %v424
  %v553 = vunpack.c.l.b16 %v425
  %v554 = vunpack.c.l.b16 %v426
  %v555 = vunpack.c.l.b16 %v427
  %v556 = vunpack.c.l.b16 %v428
  %v557 = vunpack.c.l.b16 %v429
  %v558 = vunpack.c.l.b16 %v430
  %v559 = vunpack.c.l.b16 %v431
  %v560 = vunpack.c.l.b16 %v432
  %v561 = vunpack.c.l.b16 %v433
  %v562 = vunpack.c.l.b16 %v434
  %v563 = vunpack.c.l.b16 %v435
  %v564 = vunpack.c.l.b16 %v436
  %v565 = vunpack.c.l.b16 %v437
  %v566 = vunpack.c.l.b16 %v438
  %v567 = vunpack.c.l.b16 %v439
  %v568 = vunpack.c.l.b16 %v440
  %v569 = vunpack.c.l.b16 %v441
  %v570 = vunpack.c.l.b16 %v442
  %v571 = vunpack.c.l.b16 %v443
  %v572 = vunpack.c.l.b16 %v444
  %v573 = vunpack.c.l.b16 %v445
  %v574 = vunpack.c.l.b16 %v446
  %v575 = vunpack.c.l.b16 %v447
  %v576 = vunpack.c.l.b16 %v448
  %v577 = vunpack.c.l.b16 %v449
  %v578 = vunpack.c.l.b16 %v450
  %v579 = vunpack.c.l.b16 %v451
  %v580 = vunpack.c.l.b16 %v452
  %v581 = vpack.c.b16 %v534, %v533
  %v582 = vpack.c.b16 %v536, %v535
  %v583 = vpack.c.b16 %v538, %v537
  %v584 = vpack.c.b16 %v540, %v539
  %v585 = vpack.c.b16 %v542, %v541
  %v586 = vpack.c.b16 %v544, %v543
  %v587 = vpack.c.b16 %v546, %v545
  %v588 = vpack.c.b16 %v548, %v547
  %v589 = vpack.c.b16 %v550, %v549
  %v590 = vpack.c.b16 %v552, %v551
  %v591 = vpack.c.b16 %v554, %v553
  %v592 = vpack.c.b16 %v556, %v555
  %v593 = vpack.c.b16 %v558, %v557
  %v594 = vpack.c.b16 %v560, %v559
  %v595 = vpack.c.b16 %v562, %v561
  %v596 = vpack.c.b16 %v564, %v563
  %v597 = vpack.c.b16 %v566, %v565
  %v598 = vpack.c.b16 %v568, %v567
  %v599 = vpack.c.b16 %v570, %v569
  %v600 = vpack.c.b16 %v572, %v571
  %v601 = vpack.c.b16 %v574, %v573
  %v602 = vpack.c.b16 %v576, %v575
  %v603 = vpack.c.b16 %v578, %v577
  %v604 = vpack.c.b16 %v580, %v579
  %629 = vmatpush.bf16.msra.mxu0 %v588
  %630 = vmatpush.bf16.msra.mxu0 %v587
  %631 = vmatpush.bf16.msra.mxu0 %v586
  %632 = vmatpush.bf16.msra.mxu0 %v585
  %633 = vmatpush.bf16.msra.mxu0 %v584
  %634 = vmatpush.bf16.msra.mxu0 %v583
  %635 = vmatpush.bf16.msra.mxu0 %v582
  %636 = vmatpush.bf16.msra.mxu0 %v581
  %637 = vmatmul.bf16.gmra.mxu0 %v473
  %v638 = vpop.f32.mrf.mxu0
  %v639 = vadd.f32 0.0, %v638
  %v640 = vpop.f32.mrf.mxu0
  %v641 = vadd.f32 0.0, %v640
  %642 = vmatmul.bf16.gmra.mxu0 %v476
  %v643 = vpop.f32.mrf.mxu0
  %v644 = vadd.f32 0.0, %v643
  %v645 = vpop.f32.mrf.mxu0
  %v646 = vadd.f32 0.0, %v645
  %647 = vdwg.mxu0
  %648 = vmatpush.bf16.msra.mxu0 %v596
  %649 = vmatpush.bf16.msra.mxu0 %v595
  %650 = vmatpush.bf16.msra.mxu0 %v594
  %651 = vmatpush.bf16.msra.mxu0 %v593
  %652 = vmatpush.bf16.msra.mxu0 %v592
  %653 = vmatpush.bf16.msra.mxu0 %v591
  %654 = vmatpush.bf16.msra.mxu0 %v590
  %655 = vmatpush.bf16.msra.mxu0 %v589
  %656 = vmatmul.bf16.gmra.mxu0 %v474
  %v657 = vpop.f32.mrf.mxu0
  %v658 = vadd.f32 %v639, %v657
  %v659 = vpop.f32.mrf.mxu0
  %v660 = vadd.f32 %v641, %v659
  %661 = vmatmul.bf16.gmra.mxu0 %v477
  %v662 = vpop.f32.mrf.mxu0
  %v663 = vadd.f32 %v644, %v662
  %v664 = vpop.f32.mrf.mxu0
  %v665 = vadd.f32 %v646, %v664
  %666 = vdwg.mxu0
  %667 = vmatpush.bf16.msra.mxu0 %v604
  %668 = vmatpush.bf16.msra.mxu0 %v603
  %669 = vmatpush.bf16.msra.mxu0 %v602
  %670 = vmatpush.bf16.msra.mxu0 %v601
  %671 = vmatpush.bf16.msra.mxu0 %v600
  %672 = vmatpush.bf16.msra.mxu0 %v599
  %673 = vmatpush.bf16.msra.mxu0 %v598
  %674 = vmatpush.bf16.msra.mxu0 %v597
  %675 = vmatmul.bf16.gmra.mxu0 %v475
  %v676 = vpop.f32.mrf.mxu0
  %v677 = vadd.f32 %v658, %v676
  %v678 = vpop.f32.mrf.mxu0
  %v679 = vadd.f32 %v660, %v678
  %680 = vmatmul.bf16.gmra.mxu0 %v478
  %v681 = vpop.f32.mrf.mxu0
  %v682 = vadd.f32 %v663, %v681
  %v683 = vpop.f32.mrf.mxu0
  %v684 = vadd.f32 %v665, %v683
  %685 = vdwg.mxu0
  %v686 = vld [vmem:[%s5] sm:$0x1]
  %v687 = vld [vmem:[%s6] sm:$0x1]
  %v688 = vadd.f32 %v677, %v679
  %v689 = vadd.f32 %v688, %v682
  %v690 = vadd.f32 %v689, %v684
  %v691 = vrot.slane %v690, 4
  %v692 = vadd.f32 %v690, %v691
  %v693 = vrot.slane %v692, 2
  %v694 = vadd.f32 %v692, %v693
  %v695 = vrot.slane %v694, 1
  %v696 = vadd.f32 %v694, %v695
  %697 = vrot.lane.b32.xlu0 %v696, 8
  %v698 = vpop.permute.xlu0 %697
  %v699 = vadd.f32 %v696, %v698
  %700 = vrot.lane.b32.xlu0 %v699, 16
  %v701 = vpop.permute.xlu0 %700
  %v702 = vadd.f32 %v699, %v701
  %703 = vrot.lane.b32.xlu0 %v702, 32
  %v704 = vpop.permute.xlu0 %703
  %v705 = vadd.f32 %v702, %v704
  %706 = vrot.lane.b32.xlu0 %v705, 64
  %v707 = vpop.permute.xlu0 %706
  %v708 = vadd.f32 %v705, %v707
  %v709 = vmul.f32 %v677, %v677
  %v710 = vmul.f32 %v679, %v679
  %v711 = vmul.f32 %v682, %v682
  %v712 = vmul.f32 %v684, %v684
  %v713 = vadd.f32 %v709, %v710
  %v714 = vadd.f32 %v713, %v711
  %v715 = vadd.f32 %v714, %v712
  %v716 = vrot.slane %v715, 4
  %v717 = vadd.f32 %v715, %v716
  %v718 = vrot.slane %v717, 2
  %v719 = vadd.f32 %v717, %v718
  %v720 = vrot.slane %v719, 1
  %v721 = vadd.f32 %v719, %v720
  %722 = vrot.lane.b32.xlu0 %v721, 8
  %v723 = vpop.permute.xlu0 %722
  %v724 = vadd.f32 %v721, %v723
  %725 = vrot.lane.b32.xlu0 %v724, 16
  %v726 = vpop.permute.xlu0 %725
  %v727 = vadd.f32 %v724, %v726
  %728 = vrot.lane.b32.xlu0 %v727, 32
  %v729 = vpop.permute.xlu0 %728
  %v730 = vadd.f32 %v727, %v729
  %731 = vrot.lane.b32.xlu0 %v730, 64
  %v732 = vpop.permute.xlu0 %731
  %v733 = vadd.f32 %v730, %v732
  %v734 = vmul.f32 %v708, 0.001953125
  %v735 = vmul.f32 %v733, 0.001953125
  %v736 = vmul.f32 %v734, %v734
  %v737 = vsub.f32 %v735, %v736
  %v738 = vadd.f32 %v737, 1e-05
  %v739 = vrsqrt.pop %v738
  %v740 = vmul.f32 %v739, %v738
  %v741 = vmul.f32 %v740, %v739
  %v742 = vmul.f32 0.5, %v741
  %v743 = vsub.f32 1.5, %v742
  %v744 = vmul.f32 %v739, %v743
  %vm745 = vweird.f32 %v738
  %vm746 = vweird.f32 %v739
  %vm747 = vmor %vm745, %vm746
  %v748 = vsel %vm747, %v739, %v744
  %v749 = vmul.f32 %v748, %v686
  %v750 = vperm.slane %v734, 0
  %v751 = vsub.f32 %v677, %v750
  %v752 = vsub.f32 %v679, %v750
  %v753 = vsub.f32 %v682, %v750
  %v754 = vsub.f32 %v684, %v750
  %v755 = vperm.slane %v749, 0
  %v756 = vmul.f32 %v751, %v755
  %v757 = vmul.f32 %v752, %v755
  %v758 = vmul.f32 %v753, %v755
  %v759 = vmul.f32 %v754, %v755
  %v761 = vperm.slane %v687, 0
  %v763 = vadd.f32 %v756, %v761
  %v764 = vadd.f32 %v757, %v761
  %v765 = vadd.f32 %v758, %v761
  %v766 = vadd.f32 %v759, %v761
  %v767 = vmax.f32 %v763, 0.0
  %v768 = vmax.f32 %v764, 0.0
  %v769 = vmax.f32 %v765, 0.0
  %v770 = vmax.f32 %v766, 0.0
  %771 = vst [vmem:[%s7] sm:$0xff] %v767
  %772 = vst [vmem:[%s7 + $0x8] sm:$0xff] %v768
  %773 = vst [vmem:[%s7 + $0x10] sm:$0xff] %v769
  %774 = vst [vmem:[%s7 + $0x18] sm:$0xff] %v770
  // Predicated region
  $region30: #{double_conv_forward.1} parent=0 // pred_check
    _
  $region31: #{double_conv_forward.1} parent=0 // pred_check_branch
    %776 = sbr.rel (0) target = $region33
  $region32: #{double_conv_forward.1} parent=0 // pred_region
    _
  $region33: #{double_conv_forward.1} parent=0 // pred_fallthru
    _
  // Predicated region
  $region34: #{double_conv_forward.1} parent=0 // pred_check
    _
  $region35: #{double_conv_forward.1} parent=0 // pred_check_branch
    %778 = sbr.rel (0) target = $region37
  $region36: #{double_conv_forward.1} parent=0 // pred_region
    _
  $region37: #{double_conv_forward.1} parent=0 // pred_fallthru
    _

</llo_original>
